<compile_context>
chip_gen: v7x
topology: tpu7x:2x2x1
jax: 0.10.0
libtpu: 0.0.40
codegen_flags: <defaults>
</compile_context>

<pallas_src>
import jax
import jax.numpy as jnp
from jax.experimental import pallas as pl
from jax.experimental.pallas import tpu as pltpu


# ----------------------------------------------------------------------------
# Fused TemporalAttn kernel for one batch tile.
# ----------------------------------------------------------------------------
def _temporal_attn_kernel(hs_ref, w1_ref, w2c_ref, w2h_ref, av_ref, aw_ref):
    # hs_ref : (tile_b, T, H)    hidden states for this batch tile
    # w1_ref : (H, H)            fc1, applied as x @ w1
    # w2c_ref: (H, H)            fc2 rows acting on context_vector
    # w2h_ref: (H, H)            fc2 rows acting on h_t
    # av_ref : (tile_b, H)       attention_vector output
    # aw_ref : (tile_b, T)       attention_weights output
    tile_b, t_len, _ = hs_ref.shape

    w1 = w1_ref[...]
    w2c = w2c_ref[...]
    w2h = w2h_ref[...]

    # Small static (fully unrolled) loop over the batch rows of this tile.
    # Every op below is a 2-D matmul, elementwise op, or lane/sublane reduction.
    for i in range(tile_b):
        hs_b = hs_ref[i]                                   # (T, H)
        h_t = hs_b[t_len - 1 : t_len, :]                   # (1, H) last timestep

        # fc1: score_first_part = hs_b @ W1 -> (T, H), accumulate in f32 on the MXU
        sfp = jnp.dot(hs_b, w1, preferred_element_type=jnp.float32)

        # score[t] = <score_first_part[t, :], h_t>, kept lane-oriented as (1, T)
        score = jnp.einsum(
            "ah,th->at",
            h_t.astype(jnp.float32),
            sfp,
            preferred_element_type=jnp.float32,
        )                                                  # (1, T)

        # softmax over T (lane axis)
        m = jnp.max(score, axis=-1, keepdims=True)
        e = jnp.exp(score - m)
        attn = e / jnp.sum(e, axis=-1, keepdims=True)      # (1, T)

        # context_vector = attn @ hs_b -> (1, H)
        ctx = jnp.dot(
            attn, hs_b.astype(jnp.float32), preferred_element_type=jnp.float32
        )

        # fc2(cat(ctx, h_t)) == ctx @ W2c + h_t @ W2h ; then tanh (EUP)
        pre = jnp.dot(ctx, w2c, preferred_element_type=jnp.float32) + jnp.dot(
            h_t.astype(jnp.float32), w2h, preferred_element_type=jnp.float32
        )
        av = jnp.tanh(pre)                                 # (1, H)

        av_ref[i : i + 1, :] = av.astype(av_ref.dtype)
        aw_ref[i : i + 1, :] = attn.astype(aw_ref.dtype)


# ----------------------------------------------------------------------------
# Wrapper: batch tiling, weight splitting, padding for ragged batches.
# ----------------------------------------------------------------------------
def temporal_attn_pallas(hidden_states, w1, w2):
    """TemporalAttn forward.

    hidden_states: (B, T, H)
    w1: (H, H)  such that fc1(x) = x @ w1
    w2: (2H, H) such that fc2(x) = x @ w2
    returns (attention_vector (B, H), attention_weights (B, T))
    """
    B, T, H = hidden_states.shape
    assert w1.shape == (H, H) and w2.shape == (2 * H, H)

    # Split fc2 so the kernel never concatenates along lanes.
    w2c, w2h = w2[:H, :], w2[H:, :]

    # Batch tiling: whole batch when small, else 8-row (sublane-aligned) tiles.
    tile_b = B if B <= 8 else 8
    pad = (-B) % tile_b
    hs = jnp.pad(hidden_states, ((0, pad), (0, 0), (0, 0))) if pad else hidden_states
    bp = B + pad

    av, aw = pl.pallas_call(
        _temporal_attn_kernel,
        out_shape=(
            jax.ShapeDtypeStruct((bp, H), hidden_states.dtype),
            jax.ShapeDtypeStruct((bp, T), hidden_states.dtype),
        ),
        grid=(bp // tile_b,),
        in_specs=[
            pl.BlockSpec((tile_b, T, H), lambda i: (i, 0, 0)),
            pl.BlockSpec((H, H), lambda i: (0, 0)),   # fc1 weight: VMEM-resident
            pl.BlockSpec((H, H), lambda i: (0, 0)),   # fc2 (context half)
            pl.BlockSpec((H, H), lambda i: (0, 0)),   # fc2 (h_t half)
        ],
        out_specs=(
            pl.BlockSpec((tile_b, H), lambda i: (i, 0)),
            pl.BlockSpec((tile_b, T), lambda i: (i, 0)),
        ),
        compiler_params=pltpu.CompilerParams(
            dimension_semantics=("parallel",),        # independent batch tiles (v7x 2-TC)
        ),
    )(hs, w1, w2c, w2h)

    if pad:
        av, aw = av[:B], aw[:B]
    return av, aw


if __name__ == "__main__":
    key = jax.random.PRNGKey(0)
    k_x, k_w1, k_w2 = jax.random.split(key, 3)

    B, T, H = 2, 8, 32

    hidden_states = jax.random.normal(k_x, (B, T, H), dtype=jnp.float32)
    # fc1: Linear(H, H, bias=False), stored as (in, out) so fc1(x) = x @ w1
    w1 = jax.random.uniform(k_w1, (H, H), jnp.float32, -1.0, 1.0) / jnp.sqrt(H)
    # fc2: Linear(2H, H, bias=False), stored as (in, out) so fc2(x) = x @ w2
    w2 = jax.random.uniform(k_w2, (2 * H, H), jnp.float32, -1.0, 1.0) / jnp.sqrt(2.0 * H)

    av, aw = temporal_attn_pallas(hidden_states, w1, w2)
    av, aw = jax.block_until_ready((av, aw))

    # Plain-JAX reference mirroring the PyTorch forward exactly.
    sfp_ref = hidden_states @ w1
    h_t_ref = hidden_states[:, -1, :]
    score_ref = jnp.einsum("bth,bh->bt", sfp_ref, h_t_ref)
    attn_ref = jax.nn.softmax(score_ref, axis=1)
    ctx_ref = jnp.einsum("bth,bt->bh", hidden_states, attn_ref)
    av_ref = jnp.tanh(jnp.concatenate([ctx_ref, h_t_ref], axis=1) @ w2)

    assert av.shape == (B, H), av.shape
    assert aw.shape == (B, T), aw.shape
    assert jnp.allclose(av, av_ref, atol=2e-5, rtol=2e-5), float(jnp.max(jnp.abs(av - av_ref)))
    assert jnp.allclose(aw, attn_ref, atol=2e-5, rtol=2e-5), float(jnp.max(jnp.abs(aw - attn_ref)))

    print("KERNEL_OK")
</pallas_src>

<mosaic_0001>
module attributes {stable_mosaic.version = 11 : i64} {
  func.func @_temporal_attn_kernel(%arg0: i32, %arg1: memref<2x8x32xf32, #tpu.memory_space<vmem>>, %arg2: memref<32x32xf32, #tpu.memory_space<vmem>>, %arg3: memref<32x32xf32, #tpu.memory_space<vmem>>, %arg4: memref<32x32xf32, #tpu.memory_space<vmem>>, %arg5: memref<2x32xf32, #tpu.memory_space<vmem>>, %arg6: memref<2x8xf32, #tpu.memory_space<vmem>>) attributes {dimension_semantics = [#tpu.dimension_semantics<parallel>], iteration_bounds = array<i64: 1>, scalar_prefetch = 0 : i64, scratch_operands = 0 : i64, tpu.core_type = #tpu.core_type<tc>, window_params = [{transform_indices = @transform_0, window_bounds = array<i64: 2, 8, 32>}, {pipeline_mode = #tpu.pipeline_mode<synchronous>, transform_indices = @transform_1, window_bounds = array<i64: 32, 32>}, {pipeline_mode = #tpu.pipeline_mode<synchronous>, transform_indices = @transform_2, window_bounds = array<i64: 32, 32>}, {pipeline_mode = #tpu.pipeline_mode<synchronous>, transform_indices = @transform_3, window_bounds = array<i64: 32, 32>}, {transform_indices = @transform_4, window_bounds = array<i64: 2, 32>}, {transform_indices = @transform_5, window_bounds = array<i64: 2, 8>}]} {
    %c0 = arith.constant 0 : index
    %c0_0 = arith.constant 0 : index
    %0 = vector.load %arg2[%c0, %c0_0] : memref<32x32xf32, #tpu.memory_space<vmem>>, vector<32x32xf32>
    %c0_1 = arith.constant 0 : index
    %c0_2 = arith.constant 0 : index
    %1 = vector.load %arg3[%c0_1, %c0_2] : memref<32x32xf32, #tpu.memory_space<vmem>>, vector<32x32xf32>
    %c0_3 = arith.constant 0 : index
    %c0_4 = arith.constant 0 : index
    %2 = vector.load %arg4[%c0_3, %c0_4] : memref<32x32xf32, #tpu.memory_space<vmem>>, vector<32x32xf32>
    %c0_5 = arith.constant 0 : index
    %c0_6 = arith.constant 0 : index
    %c0_7 = arith.constant 0 : index
    %3 = vector.load %arg1[%c0_5, %c0_6, %c0_7] : memref<2x8x32xf32, #tpu.memory_space<vmem>>, vector<1x8x32xf32>
    %4 = vector.shape_cast %3 : vector<1x8x32xf32> to vector<8x32xf32>
    %5 = vector.extract_strided_slice %4 {offsets = [7, 0], sizes = [1, 32], strides = [1, 1]} : vector<8x32xf32> to vector<1x32xf32>
    %cst = arith.constant dense<0.000000e+00> : vector<8x32xf32>
    %6 = tpu.matmul %4, %0, %cst {dimension_numbers = #tpu.dot_dimension_numbers<[1], [0], [0], [1], [0, 0, 1, 1], [], []>} : vector<8x32xf32>, vector<32x32xf32>, vector<8x32xf32> -> vector<8x32xf32>
    "tpu.trace_start"() <{level = 10 : i32, message = "ah,th->at"}> : () -> ()
    %cst_8 = arith.constant dense<0.000000e+00> : vector<1x8xf32>
    %7 = tpu.matmul %5, %6, %cst_8 {dimension_numbers = #tpu.dot_dimension_numbers<[1], [1], [0], [0], [0, 0, 1, 0], [], []>} : vector<1x32xf32>, vector<8x32xf32>, vector<1x8xf32> -> vector<1x8xf32>
    "tpu.trace_stop"() : () -> ()
    %cst_9 = arith.constant dense<0xFF800000> : vector<1xf32>
    %8 = vector.multi_reduction <maximumf>, %7, %cst_9 [1] : vector<1x8xf32> to vector<1xf32>
    %9 = vector.shape_cast %8 : vector<1xf32> to vector<1x1xf32>
    %10 = vector.broadcast %9 : vector<1x1xf32> to vector<1x8xf32>
    %11 = arith.subf %7, %10 : vector<1x8xf32>
    %12 = math.exp %11 : vector<1x8xf32>
    %cst_10 = arith.constant dense<0.000000e+00> : vector<1xf32>
    %13 = vector.multi_reduction <add>, %12, %cst_10 [1] : vector<1x8xf32> to vector<1xf32>
    %14 = vector.shape_cast %13 : vector<1xf32> to vector<1x1xf32>
    %15 = vector.broadcast %14 : vector<1x1xf32> to vector<1x8xf32>
    %16 = arith.divf %12, %15 : vector<1x8xf32>
    %cst_11 = arith.constant dense<0.000000e+00> : vector<1x32xf32>
    %17 = tpu.matmul %16, %4, %cst_11 {dimension_numbers = #tpu.dot_dimension_numbers<[1], [0], [0], [1], [0, 0, 1, 1], [], []>} : vector<1x8xf32>, vector<8x32xf32>, vector<1x32xf32> -> vector<1x32xf32>
    %cst_12 = arith.constant dense<0.000000e+00> : vector<1x32xf32>
    %18 = tpu.matmul %17, %1, %cst_12 {dimension_numbers = #tpu.dot_dimension_numbers<[1], [0], [0], [1], [0, 0, 1, 1], [], []>} : vector<1x32xf32>, vector<32x32xf32>, vector<1x32xf32> -> vector<1x32xf32>
    %cst_13 = arith.constant dense<0.000000e+00> : vector<1x32xf32>
    %19 = tpu.matmul %5, %2, %cst_13 {dimension_numbers = #tpu.dot_dimension_numbers<[1], [0], [0], [1], [0, 0, 1, 1], [], []>} : vector<1x32xf32>, vector<32x32xf32>, vector<1x32xf32> -> vector<1x32xf32>
    %20 = arith.addf %18, %19 : vector<1x32xf32>
    %21 = math.tanh %20 : vector<1x32xf32>
    %c0_14 = arith.constant 0 : index
    %c0_15 = arith.constant 0 : index
    %22 = vector.load %arg5[%c0_14, %c0_15] : memref<2x32xf32, #tpu.memory_space<vmem>>, vector<1x32xf32>
    tpu.vector_store %arg5[%c0_14, %c0_15], %21 {strides = array<i32>} : memref<2x32xf32, #tpu.memory_space<vmem>>, vector<1x32xf32>,
    %c0_16 = arith.constant 0 : index
    %c0_17 = arith.constant 0 : index
    %23 = vector.load %arg6[%c0_16, %c0_17] : memref<2x8xf32, #tpu.memory_space<vmem>>, vector<1x8xf32>
    tpu.vector_store %arg6[%c0_16, %c0_17], %16 {strides = array<i32>} : memref<2x8xf32, #tpu.memory_space<vmem>>, vector<1x8xf32>,
    %c1 = arith.constant 1 : index
    %c0_18 = arith.constant 0 : index
    %c0_19 = arith.constant 0 : index
    %24 = vector.load %arg1[%c1, %c0_18, %c0_19] : memref<2x8x32xf32, #tpu.memory_space<vmem>>, vector<1x8x32xf32>
    %25 = vector.shape_cast %24 : vector<1x8x32xf32> to vector<8x32xf32>
    %26 = vector.extract_strided_slice %25 {offsets = [7, 0], sizes = [1, 32], strides = [1, 1]} : vector<8x32xf32> to vector<1x32xf32>
    %cst_20 = arith.constant dense<0.000000e+00> : vector<8x32xf32>
    %27 = tpu.matmul %25, %0, %cst_20 {dimension_numbers = #tpu.dot_dimension_numbers<[1], [0], [0], [1], [0, 0, 1, 1], [], []>} : vector<8x32xf32>, vector<32x32xf32>, vector<8x32xf32> -> vector<8x32xf32>
    "tpu.trace_start"() <{level = 10 : i32, message = "ah,th->at"}> : () -> ()
    %cst_21 = arith.constant dense<0.000000e+00> : vector<1x8xf32>
    %28 = tpu.matmul %26, %27, %cst_21 {dimension_numbers = #tpu.dot_dimension_numbers<[1], [1], [0], [0], [0, 0, 1, 0], [], []>} : vector<1x32xf32>, vector<8x32xf32>, vector<1x8xf32> -> vector<1x8xf32>
    "tpu.trace_stop"() : () -> ()
    %cst_22 = arith.constant dense<0xFF800000> : vector<1xf32>
    %29 = vector.multi_reduction <maximumf>, %28, %cst_22 [1] : vector<1x8xf32> to vector<1xf32>
    %30 = vector.shape_cast %29 : vector<1xf32> to vector<1x1xf32>
    %31 = vector.broadcast %30 : vector<1x1xf32> to vector<1x8xf32>
    %32 = arith.subf %28, %31 : vector<1x8xf32>
    %33 = math.exp %32 : vector<1x8xf32>
    %cst_23 = arith.constant dense<0.000000e+00> : vector<1xf32>
    %34 = vector.multi_reduction <add>, %33, %cst_23 [1] : vector<1x8xf32> to vector<1xf32>
    %35 = vector.shape_cast %34 : vector<1xf32> to vector<1x1xf32>
    %36 = vector.broadcast %35 : vector<1x1xf32> to vector<1x8xf32>
    %37 = arith.divf %33, %36 : vector<1x8xf32>
    %cst_24 = arith.constant dense<0.000000e+00> : vector<1x32xf32>
    %38 = tpu.matmul %37, %25, %cst_24 {dimension_numbers = #tpu.dot_dimension_numbers<[1], [0], [0], [1], [0, 0, 1, 1], [], []>} : vector<1x8xf32>, vector<8x32xf32>, vector<1x32xf32> -> vector<1x32xf32>
    %cst_25 = arith.constant dense<0.000000e+00> : vector<1x32xf32>
    %39 = tpu.matmul %38, %1, %cst_25 {dimension_numbers = #tpu.dot_dimension_numbers<[1], [0], [0], [1], [0, 0, 1, 1], [], []>} : vector<1x32xf32>, vector<32x32xf32>, vector<1x32xf32> -> vector<1x32xf32>
    %cst_26 = arith.constant dense<0.000000e+00> : vector<1x32xf32>
    %40 = tpu.matmul %26, %2, %cst_26 {dimension_numbers = #tpu.dot_dimension_numbers<[1], [0], [0], [1], [0, 0, 1, 1], [], []>} : vector<1x32xf32>, vector<32x32xf32>, vector<1x32xf32> -> vector<1x32xf32>
    %41 = arith.addf %39, %40 : vector<1x32xf32>
    %42 = math.tanh %41 : vector<1x32xf32>
    %c1_27 = arith.constant 1 : index
    %c0_28 = arith.constant 0 : index
    %43 = vector.load %arg5[%c1_27, %c0_28] : memref<2x32xf32, #tpu.memory_space<vmem>>, vector<1x32xf32>
    tpu.vector_store %arg5[%c1_27, %c0_28], %42 {strides = array<i32>} : memref<2x32xf32, #tpu.memory_space<vmem>>, vector<1x32xf32>,
    %c1_29 = arith.constant 1 : index
    %c0_30 = arith.constant 0 : index
    %44 = vector.load %arg6[%c1_29, %c0_30] : memref<2x8xf32, #tpu.memory_space<vmem>>, vector<1x8xf32>
    tpu.vector_store %arg6[%c1_29, %c0_30], %37 {strides = array<i32>} : memref<2x8xf32, #tpu.memory_space<vmem>>, vector<1x8xf32>,
    return
  }
  func.func @transform_0(%arg0: i32) -> (i32, i32, i32) {
    %c0_i32 = arith.constant 0 : i32
    %c0_i32_0 = arith.constant 0 : i32
    %c0_i32_1 = arith.constant 0 : i32
    return %arg0, %c0_i32, %c0_i32_0 : i32, i32, i32
  }
  func.func @transform_1(%arg0: i32) -> (i32, i32) {
    %c0_i32 = arith.constant 0 : i32
    %c0_i32_0 = arith.constant 0 : i32
    %c0_i32_1 = arith.constant 0 : i32
    return %c0_i32, %c0_i32_0 : i32, i32
  }
  func.func @transform_2(%arg0: i32) -> (i32, i32) {
    %c0_i32 = arith.constant 0 : i32
    %c0_i32_0 = arith.constant 0 : i32
    %c0_i32_1 = arith.constant 0 : i32
    return %c0_i32, %c0_i32_0 : i32, i32
  }
  func.func @transform_3(%arg0: i32) -> (i32, i32) {
    %c0_i32 = arith.constant 0 : i32
    %c0_i32_0 = arith.constant 0 : i32
    %c0_i32_1 = arith.constant 0 : i32
    return %c0_i32, %c0_i32_0 : i32, i32
  }
  func.func @transform_4(%arg0: i32) -> (i32, i32) {
    %c0_i32 = arith.constant 0 : i32
    %c0_i32_0 = arith.constant 0 : i32
    return %arg0, %c0_i32 : i32, i32
  }
  func.func @transform_5(%arg0: i32) -> (i32, i32) {
    %c0_i32 = arith.constant 0 : i32
    %c0_i32_0 = arith.constant 0 : i32
    return %arg0, %c0_i32 : i32, i32
  }
}

</mosaic_0001>

<llo_original>
// kernel: tpu_custom_call.1
$region0: #{tpu_custom_call.1}
  #allocation0 [shape = 'u32[]', space=smem, size = 0x4, offset = 0x4, fixed_abs, tag = 'smem constant byte address 0x4 - core index']
  #allocation1 [shape = 'u32[144,128]{1,0:T(1,128)}', space=vmem, size = 0x12000, scoped, tag = 'internal scratch']
  %s0 = inlined_call_operand.hbm [shape: f32[2,8,32], index: 0, kind: input, shape index: {}]
  %s1 = inlined_call_operand.hbm [shape: f32[32,32], index: 1, kind: input, shape index: {}]
  %s2 = inlined_call_operand.hbm [shape: f32[32,32], index: 2, kind: input, shape index: {}]
  %s3 = inlined_call_operand.hbm [shape: f32[32,32], index: 3, kind: input, shape index: {}]
  %s4 = inlined_call_operand.hbm [shape: f32[2,32], index: 4, kind: output, shape index: {0}]
  %s5 = inlined_call_operand.hbm [shape: f32[2,8], index: 5, kind: output, shape index: {1}]
  %6 = xla_tuple %s4, %s5
  %s7 = sld [smem:[#allocation0]]
  $region50: #{tpu_custom_call.1} parent=0
    _
  %s9 = ssub.s32 1, %s7
  %s10 = scalar_select 0, %s9, %s7
  $region1: #{tpu_custom_call.1} parent=0
    #allocation2 [shape = 'u8[8192]{0}', space=vmem, size = 0x2000, scoped, tag = 'input window, operand 0, single buffered']
    #allocation3 [shape = 's32[1]{0}', space=sflag, size = 0x4, scoped, tag = 'scoped memory for tpu_custom_call.1']
    #allocation4 [shape = 's32[1]{0}', space=sflag, size = 0x4, scoped, tag = 'scoped memory for tpu_custom_call.1']
    #allocation5 [shape = 'u8[16384]{0}', space=vmem, size = 0x4000, scoped, tag = 'input window, operand 1, single buffered']
    #allocation6 [shape = 's32[1]{0}', space=sflag, size = 0x4, scoped, tag = 'scoped memory for tpu_custom_call.1']
    #allocation7 [shape = 'u8[16384]{0}', space=vmem, size = 0x4000, scoped, tag = 'input window, operand 2, single buffered']
    #allocation8 [shape = 'u8[16384]{0}', space=vmem, size = 0x4000, scoped, tag = 'input window, operand 3, single buffered']
    #allocation9 [shape = 's32[1]{0}', space=sflag, size = 0x4, scoped, tag = 'scoped memory for tpu_custom_call.1']
    #allocation10 [shape = 'u8[1024]{0}', space=vmem, size = 0x400, scoped, tag = 'output window, operand 0, single buffered']
    #allocation11 [shape = 'u8[1024]{0}', space=vmem, size = 0x400, scoped, tag = 'output window, operand 1, single buffered']
    #allocation12 [shape = 's32[1]{0}', space=sflag, size = 0x4, scoped, tag = 'scoped memory for tpu_custom_call.1']
    %11 = vsyncpa [#allocation3], 0
    %12 = vsyncpa [#allocation6], 0
    %13 = vsyncpa [#allocation9], 0
    %14 = vsyncpa [#allocation4], 0
    %15 = vsyncpa [#allocation12], 0
    // Predicated region
    $region2: #{tpu_custom_call.1} parent=1 // pred_check
      _
    $region3: #{tpu_custom_call.1} parent=1 // pred_check_branch
      %17 = sbr.rel (0) target = $region5
    $region4: #{tpu_custom_call.1} parent=1 // pred_region
      %s19 = ssub.s32 256, 256
      %20 = vsyncadd [#allocation3], %s19
      %s21 = sshll.u32 [#allocation2], 4
      %s22 = int_to_ptr.vmem [resolvable:$true] %s21
      %27 = dma.hbm_to_vmem [thread:$0]  %s0, 256, %s22, [#allocation3], 128, 128, 8
    $region5: #{tpu_custom_call.1} parent=1 // pred_fallthru
      _
    // Predicated region
    $region6: #{tpu_custom_call.1} parent=1 // pred_check
      _
    $region7: #{tpu_custom_call.1} parent=1 // pred_check_branch
      %29 = sbr.rel (0) target = $region9
    $region8: #{tpu_custom_call.1} parent=1 // pred_region
      %s31 = ssub.s32 512, 512
      %32 = vsyncadd [#allocation6], %s31
      %s33 = sshll.u32 [#allocation5], 4
      %s34 = int_to_ptr.vmem [resolvable:$true] %s33
      %39 = dma.hbm_to_vmem [thread:$0]  %s1, 512, %s34, [#allocation6], 128, 128, 8
    $region9: #{tpu_custom_call.1} parent=1 // pred_fallthru
      _
    // Predicated region
    $region10: #{tpu_custom_call.1} parent=1 // pred_check
      _
    $region11: #{tpu_custom_call.1} parent=1 // pred_check_branch
      %41 = sbr.rel (0) target = $region13
    $region12: #{tpu_custom_call.1} parent=1 // pred_region
      %s43 = ssub.s32 512, 512
      %44 = vsyncadd [#allocation6], %s43
      %s45 = sshll.u32 [#allocation7], 4
      %s46 = int_to_ptr.vmem [resolvable:$true] %s45
      %51 = dma.hbm_to_vmem [thread:$0]  %s2, 512, %s46, [#allocation6], 128, 128, 8
    $region13: #{tpu_custom_call.1} parent=1 // pred_fallthru
      _
    // Predicated region
    $region14: #{tpu_custom_call.1} parent=1 // pred_check
      _
    $region15: #{tpu_custom_call.1} parent=1 // pred_check_branch
      %53 = sbr.rel (0) target = $region17
    $region16: #{tpu_custom_call.1} parent=1 // pred_region
      %s55 = ssub.s32 512, 512
      %56 = vsyncadd [#allocation9], %s55
      %s57 = sshll.u32 [#allocation8], 4
      %s58 = int_to_ptr.vmem [resolvable:$true] %s57
      %63 = dma.hbm_to_vmem [thread:$0]  %s3, 512, %s58, [#allocation9], 128, 128, 8
    $region17: #{tpu_custom_call.1} parent=1 // pred_fallthru
      _
    // Predicated region
    $region18: #{tpu_custom_call.1} parent=1 // pred_check
      _
    $region19: #{tpu_custom_call.1} parent=1 // pred_check_branch
      %65 = sbr.rel (0) target = $region21
    $region20: #{tpu_custom_call.1} parent=1 // pred_region
      %66 = dma.done [#allocation3], 256
    $region21: #{tpu_custom_call.1} parent=1 // pred_fallthru
      _
    // Predicated region
    $region22: #{tpu_custom_call.1} parent=1 // pred_check
      _
    $region23: #{tpu_custom_call.1} parent=1 // pred_check_branch
      %68 = sbr.rel (0) target = $region25
    $region24: #{tpu_custom_call.1} parent=1 // pred_region
      %69 = dma.done [#allocation6], 512
    $region25: #{tpu_custom_call.1} parent=1 // pred_fallthru
      _
    // Predicated region
    $region26: #{tpu_custom_call.1} parent=1 // pred_check
      _
    $region27: #{tpu_custom_call.1} parent=1 // pred_check_branch
      %71 = sbr.rel (0) target = $region29
    $region28: #{tpu_custom_call.1} parent=1 // pred_region
      %72 = dma.done [#allocation6], 512
    $region29: #{tpu_custom_call.1} parent=1 // pred_fallthru
      _
    // Predicated region
    $region30: #{tpu_custom_call.1} parent=1 // pred_check
      _
    $region31: #{tpu_custom_call.1} parent=1 // pred_check_branch
      %74 = sbr.rel (0) target = $region33
    $region32: #{tpu_custom_call.1} parent=1 // pred_region
      %75 = dma.done [#allocation9], 512
    $region33: #{tpu_custom_call.1} parent=1 // pred_fallthru
      _
    %v76 = vld [vmem:[#allocation5] sm:$0xff]
    %v77 = vld [vmem:[#allocation5 + $0x8] sm:$0xff]
    %v78 = vld [vmem:[#allocation5 + $0x10] sm:$0xff]
    %v79 = vld [vmem:[#allocation5 + $0x18] sm:$0xff]
    %v80 = vld [vmem:[#allocation7] sm:$0xff]
    %v81 = vld [vmem:[#allocation7 + $0x8] sm:$0xff]
    %v82 = vld [vmem:[#allocation7 + $0x10] sm:$0xff]
    %v83 = vld [vmem:[#allocation7 + $0x18] sm:$0xff]
    %v84 = vld [vmem:[#allocation8] sm:$0xff]
    %v85 = vld [vmem:[#allocation8 + $0x8] sm:$0xff]
    %v86 = vld [vmem:[#allocation8 + $0x10] sm:$0xff]
    %v87 = vld [vmem:[#allocation8 + $0x18] sm:$0xff]
    %v88 = vld [vmem:[#allocation2] sm:$0xff]
    %vm89 = vcmask 261120
    %v91 = vsel %vm89, %v88, 0
    %93 = vmatprep.subr.mxu0 0.0
    %94 = vmatpush1.msra.mxu0 %v76
    %95 = vmatprep.subr.mxu0 0.0
    %96 = vmatpush1.msra.mxu0 %v77
    %97 = vmatprep.subr.mxu0 0.0
    %98 = vmatpush1.msra.mxu0 %v78
    %99 = vmatprep.subr.mxu0 0.0
    %100 = vmatpush1.msra.mxu0 %v79
    %101 = vmatprep.subr.mxu0 0.0
    %102 = vmatpush1.msra.mxu0 0.0
    %103 = vmatprep.subr.mxu0 0.0
    %104 = vmatpush1.msra.mxu0 0.0
    %105 = vmatprep.subr.mxu0 0.0
    %106 = vmatpush1.msra.mxu0 0.0
    %107 = vmatprep.subr.mxu0 0.0
    %108 = vmatpush1.msra.mxu0 0.0
    %109 = vmatprep.subr.mxu0 0.0
    %110 = vmatpush1.msra.mxu0 0.0
    %111 = vmatprep.subr.mxu0 0.0
    %112 = vmatpush1.msra.mxu0 0.0
    %113 = vmatprep.subr.mxu0 0.0
    %114 = vmatpush1.msra.mxu0 0.0
    %115 = vmatprep.subr.mxu0 0.0
    %116 = vmatpush1.msra.mxu0 0.0
    %117 = vmatprep.subr.mxu0 0.0
    %118 = vmatpush1.msra.mxu0 0.0
    %119 = vmatprep.subr.mxu0 0.0
    %120 = vmatpush1.msra.mxu0 0.0
    %121 = vmatprep.subr.mxu0 0.0
    %122 = vmatpush1.msra.mxu0 0.0
    %123 = vmatprep.subr.mxu0 0.0
    %124 = vmatpush1.msra.mxu0 0.0
    %125 = vmatprep.subr.mxu0 0.0
    %126 = vmatpush1.msra.mxu0 0.0
    %127 = vmatprep.subr.mxu0 0.0
    %128 = vmatpush1.msra.mxu0 0.0
    %129 = vmatprep.subr.mxu0 0.0
    %130 = vmatpush1.msra.mxu0 0.0
    %131 = vmatprep.subr.mxu0 0.0
    %132 = vmatpush1.msra.mxu0 0.0
    %133 = vmatprep.subr.mxu0 0.0
    %134 = vmatpush1.msra.mxu0 0.0
    %135 = vmatprep.subr.mxu0 0.0
    %136 = vmatpush1.msra.mxu0 0.0
    %137 = vmatprep.subr.mxu0 0.0
    %138 = vmatpush1.msra.mxu0 0.0
    %139 = vmatprep.subr.mxu0 0.0
    %140 = vmatpush1.msra.mxu0 0.0
    %141 = vmatprep.subr.mxu0 0.0
    %142 = vmatpush1.msra.mxu0 0.0
    %143 = vmatprep.subr.mxu0 0.0
    %144 = vmatpush1.msra.mxu0 0.0
    %145 = vmatprep.subr.mxu0 0.0
    %146 = vmatpush1.msra.mxu0 0.0
    %147 = vmatprep.subr.mxu0 0.0
    %148 = vmatpush1.msra.mxu0 0.0
    %149 = vmatprep.subr.mxu0 0.0
    %150 = vmatpush1.msra.mxu0 0.0
    %151 = vmatprep.subr.mxu0 0.0
    %152 = vmatpush1.msra.mxu0 0.0
    %153 = vmatprep.subr.mxu0 0.0
    %154 = vmatpush1.msra.mxu0 0.0
    %155 = vmatprep.subr.mxu0 0.0
    %156 = vmatpush1.msra.mxu0 0.0
    %157 = vmatprep.mubr.f32.mxu0 0.0
    %158 = vmatmul.mubr.f32.gmra.mrb[0].mxu0 %v91
    %v159 = vpop.f32.mrb[0].mxu0
    %v160 = vadd.f32 0.0, %v159
    %v161 = vpop.f32.mrb[0].mxu0
    %162 = vdwg.mxu0
    %v163 = vrot.slane %v88, 7
    %v164 = vsel %vm89, %v163, 0
    %v167 = vsel %vm89, %v160, 0
    %169 = vmatprep.subr.mxu0 0.0
    %170 = vmatpush1.xpose.msra.mxu0 %v167
    %171 = vmatprep.subr.mxu0 0.0
    %172 = vmatpush1.xpose.msra.mxu0 0.0
    %173 = vmatprep.subr.mxu0 0.0
    %174 = vmatpush1.xpose.msra.mxu0 0.0
    %175 = vmatprep.subr.mxu0 0.0
    %176 = vmatpush1.xpose.msra.mxu0 0.0
    %177 = vmatprep.subr.mxu0 0.0
    %178 = vmatpush1.xpose.msra.mxu0 0.0
    %179 = vmatprep.subr.mxu0 0.0
    %180 = vmatpush1.xpose.msra.mxu0 0.0
    %181 = vmatprep.subr.mxu0 0.0
    %182 = vmatpush1.xpose.msra.mxu0 0.0
    %183 = vmatprep.subr.mxu0 0.0
    %184 = vmatpush1.xpose.msra.mxu0 0.0
    %185 = vmatprep.subr.mxu0 0.0
    %186 = vmatpush1.xpose.msra.mxu0 0.0
    %187 = vmatprep.subr.mxu0 0.0
    %188 = vmatpush1.xpose.msra.mxu0 0.0
    %189 = vmatprep.subr.mxu0 0.0
    %190 = vmatpush1.xpose.msra.mxu0 0.0
    %191 = vmatprep.subr.mxu0 0.0
    %192 = vmatpush1.xpose.msra.mxu0 0.0
    %193 = vmatprep.subr.mxu0 0.0
    %194 = vmatpush1.xpose.msra.mxu0 0.0
    %195 = vmatprep.subr.mxu0 0.0
    %196 = vmatpush1.xpose.msra.mxu0 0.0
    %197 = vmatprep.subr.mxu0 0.0
    %198 = vmatpush1.xpose.msra.mxu0 0.0
    %199 = vmatprep.subr.mxu0 0.0
    %200 = vmatpush1.xpose.msra.mxu0 0.0
    %201 = vmatprep.subr.mxu0 0.0
    %202 = vmatpush1.xpose.msra.mxu0 0.0
    %203 = vmatprep.subr.mxu0 0.0
    %204 = vmatpush1.xpose.msra.mxu0 0.0
    %205 = vmatprep.subr.mxu0 0.0
    %206 = vmatpush1.xpose.msra.mxu0 0.0
    %207 = vmatprep.subr.mxu0 0.0
    %208 = vmatpush1.xpose.msra.mxu0 0.0
    %209 = vmatprep.subr.mxu0 0.0
    %210 = vmatpush1.xpose.msra.mxu0 0.0
    %211 = vmatprep.subr.mxu0 0.0
    %212 = vmatpush1.xpose.msra.mxu0 0.0
    %213 = vmatprep.subr.mxu0 0.0
    %214 = vmatpush1.xpose.msra.mxu0 0.0
    %215 = vmatprep.subr.mxu0 0.0
    %216 = vmatpush1.xpose.msra.mxu0 0.0
    %217 = vmatprep.subr.mxu0 0.0
    %218 = vmatpush1.xpose.msra.mxu0 0.0
    %219 = vmatprep.subr.mxu0 0.0
    %220 = vmatpush1.xpose.msra.mxu0 0.0
    %221 = vmatprep.subr.mxu0 0.0
    %222 = vmatpush1.xpose.msra.mxu0 0.0
    %223 = vmatprep.subr.mxu0 0.0
    %224 = vmatpush1.xpose.msra.mxu0 0.0
    %225 = vmatprep.subr.mxu0 0.0
    %226 = vmatpush1.xpose.msra.mxu0 0.0
    %227 = vmatprep.subr.mxu0 0.0
    %228 = vmatpush1.xpose.msra.mxu0 0.0
    %229 = vmatprep.subr.mxu0 0.0
    %230 = vmatpush1.xpose.msra.mxu0 0.0
    %231 = vmatprep.subr.mxu0 0.0
    %232 = vmatpush1.xpose.msra.mxu0 0.0
    %233 = vmatprep.mubr.f32.mxu0 0.0
    %234 = vmatmul.mubr.f32.gmra.mrb[0].mxu0 %v164
    %v235 = vpop.f32.mrb[0].mxu0
    %v236 = vadd.f32 0.0, %v235
    %v237 = vpop.f32.mrb[0].mxu0
    %238 = vdwg.mxu0
    %vm239 = vcmask 57344
    %v240 = vsel %vm239, %v236, -inf
    %241 = vmax.xlane.f32.xlu0 %v240
    %v242 = vpop.xlane.xlu0 %241
    %v243 = vsub.f32 %v236, %v242
    %v244 = vmul.f32 %v243, 1.442695
    %v245 = vpow.pop %v244
    %v246 = vsel %vm239, %v245, 0.0
    %247 = vadd.xlane.f32.xlu0 %v246
    %v248 = vpop.xlane.xlu0 %247
    %v249 = vrcp.pop %v248
    %v250 = vmul.f32 %v245, %v249
    %vm251 = vcmask 64512
    %v253 = vsel %vm251, %v250, 0
    %255 = vmatprep.subr.mxu0 0.0
    %256 = vmatpush1.msra.mxu0 %v88
    %257 = vmatprep.subr.mxu0 0.0
    %258 = vmatpush1.msra.mxu0 0.0
    %259 = vmatprep.subr.mxu0 0.0
    %260 = vmatpush1.msra.mxu0 0.0
    %261 = vmatprep.subr.mxu0 0.0
    %262 = vmatpush1.msra.mxu0 0.0
    %263 = vmatprep.subr.mxu0 0.0
    %264 = vmatpush1.msra.mxu0 0.0
    %265 = vmatprep.subr.mxu0 0.0
    %266 = vmatpush1.msra.mxu0 0.0
    %267 = vmatprep.subr.mxu0 0.0
    %268 = vmatpush1.msra.mxu0 0.0
    %269 = vmatprep.subr.mxu0 0.0
    %270 = vmatpush1.msra.mxu0 0.0
    %271 = vmatprep.subr.mxu0 0.0
    %272 = vmatpush1.msra.mxu0 0.0
    %273 = vmatprep.subr.mxu0 0.0
    %274 = vmatpush1.msra.mxu0 0.0
    %275 = vmatprep.subr.mxu0 0.0
    %276 = vmatpush1.msra.mxu0 0.0
    %277 = vmatprep.subr.mxu0 0.0
    %278 = vmatpush1.msra.mxu0 0.0
    %279 = vmatprep.subr.mxu0 0.0
    %280 = vmatpush1.msra.mxu0 0.0
    %281 = vmatprep.subr.mxu0 0.0
    %282 = vmatpush1.msra.mxu0 0.0
    %283 = vmatprep.subr.mxu0 0.0
    %284 = vmatpush1.msra.mxu0 0.0
    %285 = vmatprep.subr.mxu0 0.0
    %286 = vmatpush1.msra.mxu0 0.0
    %287 = vmatprep.subr.mxu0 0.0
    %288 = vmatpush1.msra.mxu0 0.0
    %289 = vmatprep.subr.mxu0 0.0
    %290 = vmatpush1.msra.mxu0 0.0
    %291 = vmatprep.subr.mxu0 0.0
    %292 = vmatpush1.msra.mxu0 0.0
    %293 = vmatprep.subr.mxu0 0.0
    %294 = vmatpush1.msra.mxu0 0.0
    %295 = vmatprep.subr.mxu0 0.0
    %296 = vmatpush1.msra.mxu0 0.0
    %297 = vmatprep.subr.mxu0 0.0
    %298 = vmatpush1.msra.mxu0 0.0
    %299 = vmatprep.subr.mxu0 0.0
    %300 = vmatpush1.msra.mxu0 0.0
    %301 = vmatprep.subr.mxu0 0.0
    %302 = vmatpush1.msra.mxu0 0.0
    %303 = vmatprep.subr.mxu0 0.0
    %304 = vmatpush1.msra.mxu0 0.0
    %305 = vmatprep.subr.mxu0 0.0
    %306 = vmatpush1.msra.mxu0 0.0
    %307 = vmatprep.subr.mxu0 0.0
    %308 = vmatpush1.msra.mxu0 0.0
    %309 = vmatprep.subr.mxu0 0.0
    %310 = vmatpush1.msra.mxu0 0.0
    %311 = vmatprep.subr.mxu0 0.0
    %312 = vmatpush1.msra.mxu0 0.0
    %313 = vmatprep.subr.mxu0 0.0
    %314 = vmatpush1.msra.mxu0 0.0
    %315 = vmatprep.subr.mxu0 0.0
    %316 = vmatpush1.msra.mxu0 0.0
    %317 = vmatprep.subr.mxu0 0.0
    %318 = vmatpush1.msra.mxu0 0.0
    %319 = vmatprep.mubr.f32.mxu0 0.0
    %320 = vmatmul.mubr.f32.gmra.mrb[0].mxu0 %v253
    %v321 = vpop.f32.mrb[0].mxu0
    %v322 = vadd.f32 0.0, %v321
    %v323 = vpop.f32.mrb[0].mxu0
    %324 = vdwg.mxu0
    %325 = vmatprep.subr.mxu0 0.0
    %326 = vmatpush1.msra.mxu0 %v84
    %327 = vmatprep.subr.mxu0 0.0
    %328 = vmatpush1.msra.mxu0 %v85
    %329 = vmatprep.subr.mxu0 0.0
    %330 = vmatpush1.msra.mxu0 %v86
    %331 = vmatprep.subr.mxu0 0.0
    %332 = vmatpush1.msra.mxu0 %v87
    %333 = vmatprep.subr.mxu0 0.0
    %334 = vmatpush1.msra.mxu0 0.0
    %335 = vmatprep.subr.mxu0 0.0
    %336 = vmatpush1.msra.mxu0 0.0
    %337 = vmatprep.subr.mxu0 0.0
    %338 = vmatpush1.msra.mxu0 0.0
    %339 = vmatprep.subr.mxu0 0.0
    %340 = vmatpush1.msra.mxu0 0.0
    %341 = vmatprep.subr.mxu0 0.0
    %342 = vmatpush1.msra.mxu0 0.0
    %343 = vmatprep.subr.mxu0 0.0
    %344 = vmatpush1.msra.mxu0 0.0
    %345 = vmatprep.subr.mxu0 0.0
    %346 = vmatpush1.msra.mxu0 0.0
    %347 = vmatprep.subr.mxu0 0.0
    %348 = vmatpush1.msra.mxu0 0.0
    %349 = vmatprep.subr.mxu0 0.0
    %350 = vmatpush1.msra.mxu0 0.0
    %351 = vmatprep.subr.mxu0 0.0
    %352 = vmatpush1.msra.mxu0 0.0
    %353 = vmatprep.subr.mxu0 0.0
    %354 = vmatpush1.msra.mxu0 0.0
    %355 = vmatprep.subr.mxu0 0.0
    %356 = vmatpush1.msra.mxu0 0.0
    %357 = vmatprep.subr.mxu0 0.0
    %358 = vmatpush1.msra.mxu0 0.0
    %359 = vmatprep.subr.mxu0 0.0
    %360 = vmatpush1.msra.mxu0 0.0
    %361 = vmatprep.subr.mxu0 0.0
    %362 = vmatpush1.msra.mxu0 0.0
    %363 = vmatprep.subr.mxu0 0.0
    %364 = vmatpush1.msra.mxu0 0.0
    %365 = vmatprep.subr.mxu0 0.0
    %366 = vmatpush1.msra.mxu0 0.0
    %367 = vmatprep.subr.mxu0 0.0
    %368 = vmatpush1.msra.mxu0 0.0
    %369 = vmatprep.subr.mxu0 0.0
    %370 = vmatpush1.msra.mxu0 0.0
    %371 = vmatprep.subr.mxu0 0.0
    %372 = vmatpush1.msra.mxu0 0.0
    %373 = vmatprep.subr.mxu0 0.0
    %374 = vmatpush1.msra.mxu0 0.0
    %375 = vmatprep.subr.mxu0 0.0
    %376 = vmatpush1.msra.mxu0 0.0
    %377 = vmatprep.subr.mxu0 0.0
    %378 = vmatpush1.msra.mxu0 0.0
    %379 = vmatprep.subr.mxu0 0.0
    %380 = vmatpush1.msra.mxu0 0.0
    %381 = vmatprep.subr.mxu0 0.0
    %382 = vmatpush1.msra.mxu0 0.0
    %383 = vmatprep.subr.mxu0 0.0
    %384 = vmatpush1.msra.mxu0 0.0
    %385 = vmatprep.subr.mxu0 0.0
    %386 = vmatpush1.msra.mxu0 0.0
    %387 = vmatprep.subr.mxu0 0.0
    %388 = vmatpush1.msra.mxu0 0.0
    %389 = vmatprep.mubr.f32.mxu0 0.0
    %390 = vmatmul.mubr.f32.gmra.mrb[0].mxu0 %v164
    %v391 = vpop.f32.mrb[0].mxu0
    %v392 = vadd.f32 0.0, %v391
    %v393 = vpop.f32.mrb[0].mxu0
    %394 = vdwg.mxu0
    %v396 = vsel %vm89, %v322, 0
    %398 = vmatprep.subr.mxu0 0.0
    %399 = vmatpush1.msra.mxu0 %v80
    %400 = vmatprep.subr.mxu0 0.0
    %401 = vmatpush1.msra.mxu0 %v81
    %402 = vmatprep.subr.mxu0 0.0
    %403 = vmatpush1.msra.mxu0 %v82
    %404 = vmatprep.subr.mxu0 0.0
    %405 = vmatpush1.msra.mxu0 %v83
    %406 = vmatprep.subr.mxu0 0.0
    %407 = vmatpush1.msra.mxu0 0.0
    %408 = vmatprep.subr.mxu0 0.0
    %409 = vmatpush1.msra.mxu0 0.0
    %410 = vmatprep.subr.mxu0 0.0
    %411 = vmatpush1.msra.mxu0 0.0
    %412 = vmatprep.subr.mxu0 0.0
    %413 = vmatpush1.msra.mxu0 0.0
    %414 = vmatprep.subr.mxu0 0.0
    %415 = vmatpush1.msra.mxu0 0.0
    %416 = vmatprep.subr.mxu0 0.0
    %417 = vmatpush1.msra.mxu0 0.0
    %418 = vmatprep.subr.mxu0 0.0
    %419 = vmatpush1.msra.mxu0 0.0
    %420 = vmatprep.subr.mxu0 0.0
    %421 = vmatpush1.msra.mxu0 0.0
    %422 = vmatprep.subr.mxu0 0.0
    %423 = vmatpush1.msra.mxu0 0.0
    %424 = vmatprep.subr.mxu0 0.0
    %425 = vmatpush1.msra.mxu0 0.0
    %426 = vmatprep.subr.mxu0 0.0
    %427 = vmatpush1.msra.mxu0 0.0
    %428 = vmatprep.subr.mxu0 0.0
    %429 = vmatpush1.msra.mxu0 0.0
    %430 = vmatprep.subr.mxu0 0.0
    %431 = vmatpush1.msra.mxu0 0.0
    %432 = vmatprep.subr.mxu0 0.0
    %433 = vmatpush1.msra.mxu0 0.0
    %434 = vmatprep.subr.mxu0 0.0
    %435 = vmatpush1.msra.mxu0 0.0
    %436 = vmatprep.subr.mxu0 0.0
    %437 = vmatpush1.msra.mxu0 0.0
    %438 = vmatprep.subr.mxu0 0.0
    %439 = vmatpush1.msra.mxu0 0.0
    %440 = vmatprep.subr.mxu0 0.0
    %441 = vmatpush1.msra.mxu0 0.0
    %442 = vmatprep.subr.mxu0 0.0
    %443 = vmatpush1.msra.mxu0 0.0
    %444 = vmatprep.subr.mxu0 0.0
    %445 = vmatpush1.msra.mxu0 0.0
    %446 = vmatprep.subr.mxu0 0.0
    %447 = vmatpush1.msra.mxu0 0.0
    %448 = vmatprep.subr.mxu0 0.0
    %449 = vmatpush1.msra.mxu0 0.0
    %450 = vmatprep.subr.mxu0 0.0
    %451 = vmatpush1.msra.mxu0 0.0
    %452 = vmatprep.subr.mxu0 0.0
    %453 = vmatpush1.msra.mxu0 0.0
    %454 = vmatprep.subr.mxu0 0.0
    %455 = vmatpush1.msra.mxu0 0.0
    %456 = vmatprep.subr.mxu0 0.0
    %457 = vmatpush1.msra.mxu0 0.0
    %458 = vmatprep.subr.mxu0 0.0
    %459 = vmatpush1.msra.mxu0 0.0
    %460 = vmatprep.subr.mxu0 0.0
    %461 = vmatpush1.msra.mxu0 0.0
    %462 = vmatprep.mubr.f32.mxu0 0.0
    %463 = vmatmul.mubr.f32.gmra.mrb[0].mxu0 %v396
    %v464 = vpop.f32.mrb[0].mxu0
    %v465 = vadd.f32 %v392, %v464
    %v466 = vpop.f32.mrb[0].mxu0
    %467 = vdwg.mxu0
    %v468 = vtanh.pop %v465
    %vm469 = vcmask 253952
    %470 = vst.msk [vmem:[#allocation10] sm:$0x1] %vm469, %v468
    %471 = vst.msk [vmem:[#allocation11] sm:$0x1] %vm239, %v250
    %s472 = scalar_lea.vmem [#allocation2], 8
    %v473 = vld [vmem:[%s472] sm:$0xff]
    %v475 = vsel %vm89, %v473, 0
    %477 = vmatprep.subr.mxu0 0.0
    %478 = vmatpush1.msra.mxu0 %v76
    %479 = vmatprep.subr.mxu0 0.0
    %480 = vmatpush1.msra.mxu0 %v77
    %481 = vmatprep.subr.mxu0 0.0
    %482 = vmatpush1.msra.mxu0 %v78
    %483 = vmatprep.subr.mxu0 0.0
    %484 = vmatpush1.msra.mxu0 %v79
    %485 = vmatprep.subr.mxu0 0.0
    %486 = vmatpush1.msra.mxu0 0.0
    %487 = vmatprep.subr.mxu0 0.0
    %488 = vmatpush1.msra.mxu0 0.0
    %489 = vmatprep.subr.mxu0 0.0
    %490 = vmatpush1.msra.mxu0 0.0
    %491 = vmatprep.subr.mxu0 0.0
    %492 = vmatpush1.msra.mxu0 0.0
    %493 = vmatprep.subr.mxu0 0.0
    %494 = vmatpush1.msra.mxu0 0.0
    %495 = vmatprep.subr.mxu0 0.0
    %496 = vmatpush1.msra.mxu0 0.0
    %497 = vmatprep.subr.mxu0 0.0
    %498 = vmatpush1.msra.mxu0 0.0
    %499 = vmatprep.subr.mxu0 0.0
    %500 = vmatpush1.msra.mxu0 0.0
    %501 = vmatprep.subr.mxu0 0.0
    %502 = vmatpush1.msra.mxu0 0.0
    %503 = vmatprep.subr.mxu0 0.0
    %504 = vmatpush1.msra.mxu0 0.0
    %505 = vmatprep.subr.mxu0 0.0
    %506 = vmatpush1.msra.mxu0 0.0
    %507 = vmatprep.subr.mxu0 0.0
    %508 = vmatpush1.msra.mxu0 0.0
    %509 = vmatprep.subr.mxu0 0.0
    %510 = vmatpush1.msra.mxu0 0.0
    %511 = vmatprep.subr.mxu0 0.0
    %512 = vmatpush1.msra.mxu0 0.0
    %513 = vmatprep.subr.mxu0 0.0
    %514 = vmatpush1.msra.mxu0 0.0
    %515 = vmatprep.subr.mxu0 0.0
    %516 = vmatpush1.msra.mxu0 0.0
    %517 = vmatprep.subr.mxu0 0.0
    %518 = vmatpush1.msra.mxu0 0.0
    %519 = vmatprep.subr.mxu0 0.0
    %520 = vmatpush1.msra.mxu0 0.0
    %521 = vmatprep.subr.mxu0 0.0
    %522 = vmatpush1.msra.mxu0 0.0
    %523 = vmatprep.subr.mxu0 0.0
    %524 = vmatpush1.msra.mxu0 0.0
    %525 = vmatprep.subr.mxu0 0.0
    %526 = vmatpush1.msra.mxu0 0.0
    %527 = vmatprep.subr.mxu0 0.0
    %528 = vmatpush1.msra.mxu0 0.0
    %529 = vmatprep.subr.mxu0 0.0
    %530 = vmatpush1.msra.mxu0 0.0
    %531 = vmatprep.subr.mxu0 0.0
    %532 = vmatpush1.msra.mxu0 0.0
    %533 = vmatprep.subr.mxu0 0.0
    %534 = vmatpush1.msra.mxu0 0.0
    %535 = vmatprep.subr.mxu0 0.0
    %536 = vmatpush1.msra.mxu0 0.0
    %537 = vmatprep.subr.mxu0 0.0
    %538 = vmatpush1.msra.mxu0 0.0
    %539 = vmatprep.subr.mxu0 0.0
    %540 = vmatpush1.msra.mxu0 0.0
    %541 = vmatprep.mubr.f32.mxu0 0.0
    %542 = vmatmul.mubr.f32.gmra.mrb[0].mxu0 %v475
    %v543 = vpop.f32.mrb[0].mxu0
    %v544 = vadd.f32 0.0, %v543
    %v545 = vpop.f32.mrb[0].mxu0
    %546 = vdwg.mxu0
    %v547 = vrot.slane %v473, 7
    %v548 = vsel %vm89, %v547, 0
    %v551 = vsel %vm89, %v544, 0
    %553 = vmatprep.subr.mxu0 0.0
    %554 = vmatpush1.xpose.msra.mxu0 %v551
    %555 = vmatprep.subr.mxu0 0.0
    %556 = vmatpush1.xpose.msra.mxu0 0.0
    %557 = vmatprep.subr.mxu0 0.0
    %558 = vmatpush1.xpose.msra.mxu0 0.0
    %559 = vmatprep.subr.mxu0 0.0
    %560 = vmatpush1.xpose.msra.mxu0 0.0
    %561 = vmatprep.subr.mxu0 0.0
    %562 = vmatpush1.xpose.msra.mxu0 0.0
    %563 = vmatprep.subr.mxu0 0.0
    %564 = vmatpush1.xpose.msra.mxu0 0.0
    %565 = vmatprep.subr.mxu0 0.0
    %566 = vmatpush1.xpose.msra.mxu0 0.0
    %567 = vmatprep.subr.mxu0 0.0
    %568 = vmatpush1.xpose.msra.mxu0 0.0
    %569 = vmatprep.subr.mxu0 0.0
    %570 = vmatpush1.xpose.msra.mxu0 0.0
    %571 = vmatprep.subr.mxu0 0.0
    %572 = vmatpush1.xpose.msra.mxu0 0.0
    %573 = vmatprep.subr.mxu0 0.0
    %574 = vmatpush1.xpose.msra.mxu0 0.0
    %575 = vmatprep.subr.mxu0 0.0
    %576 = vmatpush1.xpose.msra.mxu0 0.0
    %577 = vmatprep.subr.mxu0 0.0
    %578 = vmatpush1.xpose.msra.mxu0 0.0
    %579 = vmatprep.subr.mxu0 0.0
    %580 = vmatpush1.xpose.msra.mxu0 0.0
    %581 = vmatprep.subr.mxu0 0.0
    %582 = vmatpush1.xpose.msra.mxu0 0.0
    %583 = vmatprep.subr.mxu0 0.0
    %584 = vmatpush1.xpose.msra.mxu0 0.0
    %585 = vmatprep.subr.mxu0 0.0
    %586 = vmatpush1.xpose.msra.mxu0 0.0
    %587 = vmatprep.subr.mxu0 0.0
    %588 = vmatpush1.xpose.msra.mxu0 0.0
    %589 = vmatprep.subr.mxu0 0.0
    %590 = vmatpush1.xpose.msra.mxu0 0.0
    %591 = vmatprep.subr.mxu0 0.0
    %592 = vmatpush1.xpose.msra.mxu0 0.0
    %593 = vmatprep.subr.mxu0 0.0
    %594 = vmatpush1.xpose.msra.mxu0 0.0
    %595 = vmatprep.subr.mxu0 0.0
    %596 = vmatpush1.xpose.msra.mxu0 0.0
    %597 = vmatprep.subr.mxu0 0.0
    %598 = vmatpush1.xpose.msra.mxu0 0.0
    %599 = vmatprep.subr.mxu0 0.0
    %600 = vmatpush1.xpose.msra.mxu0 0.0
    %601 = vmatprep.subr.mxu0 0.0
    %602 = vmatpush1.xpose.msra.mxu0 0.0
    %603 = vmatprep.subr.mxu0 0.0
    %604 = vmatpush1.xpose.msra.mxu0 0.0
    %605 = vmatprep.subr.mxu0 0.0
    %606 = vmatpush1.xpose.msra.mxu0 0.0
    %607 = vmatprep.subr.mxu0 0.0
    %608 = vmatpush1.xpose.msra.mxu0 0.0
    %609 = vmatprep.subr.mxu0 0.0
    %610 = vmatpush1.xpose.msra.mxu0 0.0
    %611 = vmatprep.subr.mxu0 0.0
    %612 = vmatpush1.xpose.msra.mxu0 0.0
    %613 = vmatprep.subr.mxu0 0.0
    %614 = vmatpush1.xpose.msra.mxu0 0.0
    %615 = vmatprep.subr.mxu0 0.0
    %616 = vmatpush1.xpose.msra.mxu0 0.0
    %617 = vmatprep.mubr.f32.mxu0 0.0
    %618 = vmatmul.mubr.f32.gmra.mrb[0].mxu0 %v548
    %v619 = vpop.f32.mrb[0].mxu0
    %v620 = vadd.f32 0.0, %v619
    %v621 = vpop.f32.mrb[0].mxu0
    %622 = vdwg.mxu0
    %v623 = vsel %vm239, %v620, -inf
    %624 = vmax.xlane.f32.xlu0 %v623
    %v625 = vpop.xlane.xlu0 %624
    %v626 = vsub.f32 %v620, %v625
    %v627 = vmul.f32 %v626, 1.442695
    %v628 = vpow.pop %v627
    %v629 = vsel %vm239, %v628, 0.0
    %630 = vadd.xlane.f32.xlu0 %v629
    %v631 = vpop.xlane.xlu0 %630
    %v632 = vrcp.pop %v631
    %v633 = vmul.f32 %v628, %v632
    %v635 = vsel %vm251, %v633, 0
    %637 = vmatprep.subr.mxu0 0.0
    %638 = vmatpush1.msra.mxu0 %v473
    %639 = vmatprep.subr.mxu0 0.0
    %640 = vmatpush1.msra.mxu0 0.0
    %641 = vmatprep.subr.mxu0 0.0
    %642 = vmatpush1.msra.mxu0 0.0
    %643 = vmatprep.subr.mxu0 0.0
    %644 = vmatpush1.msra.mxu0 0.0
    %645 = vmatprep.subr.mxu0 0.0
    %646 = vmatpush1.msra.mxu0 0.0
    %647 = vmatprep.subr.mxu0 0.0
    %648 = vmatpush1.msra.mxu0 0.0
    %649 = vmatprep.subr.mxu0 0.0
    %650 = vmatpush1.msra.mxu0 0.0
    %651 = vmatprep.subr.mxu0 0.0
    %652 = vmatpush1.msra.mxu0 0.0
    %653 = vmatprep.subr.mxu0 0.0
    %654 = vmatpush1.msra.mxu0 0.0
    %655 = vmatprep.subr.mxu0 0.0
    %656 = vmatpush1.msra.mxu0 0.0
    %657 = vmatprep.subr.mxu0 0.0
    %658 = vmatpush1.msra.mxu0 0.0
    %659 = vmatprep.subr.mxu0 0.0
    %660 = vmatpush1.msra.mxu0 0.0
    %661 = vmatprep.subr.mxu0 0.0
    %662 = vmatpush1.msra.mxu0 0.0
    %663 = vmatprep.subr.mxu0 0.0
    %664 = vmatpush1.msra.mxu0 0.0
    %665 = vmatprep.subr.mxu0 0.0
    %666 = vmatpush1.msra.mxu0 0.0
    %667 = vmatprep.subr.mxu0 0.0
    %668 = vmatpush1.msra.mxu0 0.0
    %669 = vmatprep.subr.mxu0 0.0
    %670 = vmatpush1.msra.mxu0 0.0
    %671 = vmatprep.subr.mxu0 0.0
    %672 = vmatpush1.msra.mxu0 0.0
    %673 = vmatprep.subr.mxu0 0.0
    %674 = vmatpush1.msra.mxu0 0.0
    %675 = vmatprep.subr.mxu0 0.0
    %676 = vmatpush1.msra.mxu0 0.0
    %677 = vmatprep.subr.mxu0 0.0
    %678 = vmatpush1.msra.mxu0 0.0
    %679 = vmatprep.subr.mxu0 0.0
    %680 = vmatpush1.msra.mxu0 0.0
    %681 = vmatprep.subr.mxu0 0.0
    %682 = vmatpush1.msra.mxu0 0.0
    %683 = vmatprep.subr.mxu0 0.0
    %684 = vmatpush1.msra.mxu0 0.0
    %685 = vmatprep.subr.mxu0 0.0
    %686 = vmatpush1.msra.mxu0 0.0
    %687 = vmatprep.subr.mxu0 0.0
    %688 = vmatpush1.msra.mxu0 0.0
    %689 = vmatprep.subr.mxu0 0.0
    %690 = vmatpush1.msra.mxu0 0.0
    %691 = vmatprep.subr.mxu0 0.0
    %692 = vmatpush1.msra.mxu0 0.0
    %693 = vmatprep.subr.mxu0 0.0
    %694 = vmatpush1.msra.mxu0 0.0
    %695 = vmatprep.subr.mxu0 0.0
    %696 = vmatpush1.msra.mxu0 0.0
    %697 = vmatprep.subr.mxu0 0.0
    %698 = vmatpush1.msra.mxu0 0.0
    %699 = vmatprep.subr.mxu0 0.0
    %700 = vmatpush1.msra.mxu0 0.0
    %701 = vmatprep.mubr.f32.mxu0 0.0
    %702 = vmatmul.mubr.f32.gmra.mrb[0].mxu0 %v635
    %v703 = vpop.f32.mrb[0].mxu0
    %v704 = vadd.f32 0.0, %v703
    %v705 = vpop.f32.mrb[0].mxu0
    %706 = vdwg.mxu0
    %707 = vmatprep.subr.mxu0 0.0
    %708 = vmatpush1.msra.mxu0 %v84
    %709 = vmatprep.subr.mxu0 0.0
    %710 = vmatpush1.msra.mxu0 %v85
    %711 = vmatprep.subr.mxu0 0.0
    %712 = vmatpush1.msra.mxu0 %v86
    %713 = vmatprep.subr.mxu0 0.0
    %714 = vmatpush1.msra.mxu0 %v87
    %715 = vmatprep.subr.mxu0 0.0
    %716 = vmatpush1.msra.mxu0 0.0
    %717 = vmatprep.subr.mxu0 0.0
    %718 = vmatpush1.msra.mxu0 0.0
    %719 = vmatprep.subr.mxu0 0.0
    %720 = vmatpush1.msra.mxu0 0.0
    %721 = vmatprep.subr.mxu0 0.0
    %722 = vmatpush1.msra.mxu0 0.0
    %723 = vmatprep.subr.mxu0 0.0
    %724 = vmatpush1.msra.mxu0 0.0
    %725 = vmatprep.subr.mxu0 0.0
    %726 = vmatpush1.msra.mxu0 0.0
    %727 = vmatprep.subr.mxu0 0.0
    %728 = vmatpush1.msra.mxu0 0.0
    %729 = vmatprep.subr.mxu0 0.0
    %730 = vmatpush1.msra.mxu0 0.0
    %731 = vmatprep.subr.mxu0 0.0
    %732 = vmatpush1.msra.mxu0 0.0
    %733 = vmatprep.subr.mxu0 0.0
    %734 = vmatpush1.msra.mxu0 0.0
    %735 = vmatprep.subr.mxu0 0.0
    %736 = vmatpush1.msra.mxu0 0.0
    %737 = vmatprep.subr.mxu0 0.0
    %738 = vmatpush1.msra.mxu0 0.0
    %739 = vmatprep.subr.mxu0 0.0
    %740 = vmatpush1.msra.mxu0 0.0
    %741 = vmatprep.subr.mxu0 0.0
    %742 = vmatpush1.msra.mxu0 0.0
    %743 = vmatprep.subr.mxu0 0.0
    %744 = vmatpush1.msra.mxu0 0.0
    %745 = vmatprep.subr.mxu0 0.0
    %746 = vmatpush1.msra.mxu0 0.0
    %747 = vmatprep.subr.mxu0 0.0
    %748 = vmatpush1.msra.mxu0 0.0
    %749 = vmatprep.subr.mxu0 0.0
    %750 = vmatpush1.msra.mxu0 0.0
    %751 = vmatprep.subr.mxu0 0.0
    %752 = vmatpush1.msra.mxu0 0.0
    %753 = vmatprep.subr.mxu0 0.0
    %754 = vmatpush1.msra.mxu0 0.0
    %755 = vmatprep.subr.mxu0 0.0
    %756 = vmatpush1.msra.mxu0 0.0
    %757 = vmatprep.subr.mxu0 0.0
    %758 = vmatpush1.msra.mxu0 0.0
    %759 = vmatprep.subr.mxu0 0.0
    %760 = vmatpush1.msra.mxu0 0.0
    %761 = vmatprep.subr.mxu0 0.0
    %762 = vmatpush1.msra.mxu0 0.0
    %763 = vmatprep.subr.mxu0 0.0
    %764 = vmatpush1.msra.mxu0 0.0
    %765 = vmatprep.subr.mxu0 0.0
    %766 = vmatpush1.msra.mxu0 0.0
    %767 = vmatprep.subr.mxu0 0.0
    %768 = vmatpush1.msra.mxu0 0.0
    %769 = vmatprep.subr.mxu0 0.0
    %770 = vmatpush1.msra.mxu0 0.0
    %771 = vmatprep.mubr.f32.mxu0 0.0
    %772 = vmatmul.mubr.f32.gmra.mrb[0].mxu0 %v548
    %v773 = vpop.f32.mrb[0].mxu0
    %v774 = vadd.f32 0.0, %v773
    %v775 = vpop.f32.mrb[0].mxu0
    %776 = vdwg.mxu0
    %v778 = vsel %vm89, %v704, 0
    %780 = vmatprep.subr.mxu0 0.0
    %781 = vmatpush1.msra.mxu0 %v80
    %782 = vmatprep.subr.mxu0 0.0
    %783 = vmatpush1.msra.mxu0 %v81
    %784 = vmatprep.subr.mxu0 0.0
    %785 = vmatpush1.msra.mxu0 %v82
    %786 = vmatprep.subr.mxu0 0.0
    %787 = vmatpush1.msra.mxu0 %v83
    %788 = vmatprep.subr.mxu0 0.0
    %789 = vmatpush1.msra.mxu0 0.0
    %790 = vmatprep.subr.mxu0 0.0
    %791 = vmatpush1.msra.mxu0 0.0
    %792 = vmatprep.subr.mxu0 0.0
    %793 = vmatpush1.msra.mxu0 0.0
    %794 = vmatprep.subr.mxu0 0.0
    %795 = vmatpush1.msra.mxu0 0.0
    %796 = vmatprep.subr.mxu0 0.0
    %797 = vmatpush1.msra.mxu0 0.0
    %798 = vmatprep.subr.mxu0 0.0
    %799 = vmatpush1.msra.mxu0 0.0
    %800 = vmatprep.subr.mxu0 0.0
    %801 = vmatpush1.msra.mxu0 0.0
    %802 = vmatprep.subr.mxu0 0.0
    %803 = vmatpush1.msra.mxu0 0.0
    %804 = vmatprep.subr.mxu0 0.0
    %805 = vmatpush1.msra.mxu0 0.0
    %806 = vmatprep.subr.mxu0 0.0
    %807 = vmatpush1.msra.mxu0 0.0
    %808 = vmatprep.subr.mxu0 0.0
    %809 = vmatpush1.msra.mxu0 0.0
    %810 = vmatprep.subr.mxu0 0.0
    %811 = vmatpush1.msra.mxu0 0.0
    %812 = vmatprep.subr.mxu0 0.0
    %813 = vmatpush1.msra.mxu0 0.0
    %814 = vmatprep.subr.mxu0 0.0
    %815 = vmatpush1.msra.mxu0 0.0
    %816 = vmatprep.subr.mxu0 0.0
    %817 = vmatpush1.msra.mxu0 0.0
    %818 = vmatprep.subr.mxu0 0.0
    %819 = vmatpush1.msra.mxu0 0.0
    %820 = vmatprep.subr.mxu0 0.0
    %821 = vmatpush1.msra.mxu0 0.0
    %822 = vmatprep.subr.mxu0 0.0
    %823 = vmatpush1.msra.mxu0 0.0
    %824 = vmatprep.subr.mxu0 0.0
    %825 = vmatpush1.msra.mxu0 0.0
    %826 = vmatprep.subr.mxu0 0.0
    %827 = vmatpush1.msra.mxu0 0.0
    %828 = vmatprep.subr.mxu0 0.0
    %829 = vmatpush1.msra.mxu0 0.0
    %830 = vmatprep.subr.mxu0 0.0
    %831 = vmatpush1.msra.mxu0 0.0
    %832 = vmatprep.subr.mxu0 0.0
    %833 = vmatpush1.msra.mxu0 0.0
    %834 = vmatprep.subr.mxu0 0.0
    %835 = vmatpush1.msra.mxu0 0.0
    %836 = vmatprep.subr.mxu0 0.0
    %837 = vmatpush1.msra.mxu0 0.0
    %838 = vmatprep.subr.mxu0 0.0
    %839 = vmatpush1.msra.mxu0 0.0
    %840 = vmatprep.subr.mxu0 0.0
    %841 = vmatpush1.msra.mxu0 0.0
    %842 = vmatprep.subr.mxu0 0.0
    %843 = vmatpush1.msra.mxu0 0.0
    %844 = vmatprep.mubr.f32.mxu0 0.0
    %845 = vmatmul.mubr.f32.gmra.mrb[0].mxu0 %v778
    %v846 = vpop.f32.mrb[0].mxu0
    %v847 = vadd.f32 %v774, %v846
    %v848 = vpop.f32.mrb[0].mxu0
    %849 = vdwg.mxu0
    %v850 = vtanh.pop %v847
    %851 = vst.msk [vmem:[#allocation10 + $0x1] sm:$0x1] %vm469, %v850
    %852 = vst.msk [vmem:[#allocation11 + $0x1] sm:$0x1] %vm239, %v633
    // Predicated region
    $region34: #{tpu_custom_call.1} parent=1 // pred_check
      _
    $region35: #{tpu_custom_call.1} parent=1 // pred_check_branch
      %854 = sbr.rel (0) target = $region37
    $region36: #{tpu_custom_call.1} parent=1 // pred_region
      %s856 = ssub.s32 32, 32
      %857 = vsyncadd [#allocation4], %s856
      %s859 = sshll.u32 [#allocation10], 4
      %s860 = int_to_ptr.vmem [resolvable:$true] %s859
      %862 = dma.vmem_to_hbm [thread:$0]  %s860, 32, %s4, [#allocation4]
    $region37: #{tpu_custom_call.1} parent=1 // pred_fallthru
      _
    // Predicated region
    $region38: #{tpu_custom_call.1} parent=1 // pred_check
      _
    $region39: #{tpu_custom_call.1} parent=1 // pred_check_branch
      %864 = sbr.rel (0) target = $region41
    $region40: #{tpu_custom_call.1} parent=1 // pred_region
      %s866 = ssub.s32 32, 32
      %867 = vsyncadd [#allocation12], %s866
      %s869 = sshll.u32 [#allocation11], 4
      %s870 = int_to_ptr.vmem [resolvable:$true] %s869
      %872 = dma.vmem_to_hbm [thread:$0]  %s870, 32, %s5, [#allocation12]
    $region41: #{tpu_custom_call.1} parent=1 // pred_fallthru
      _
    // Predicated region
    $region42: #{tpu_custom_call.1} parent=1 // pred_check
      _
    $region43: #{tpu_custom_call.1} parent=1 // pred_check_branch
      %874 = sbr.rel (0) target = $region45
    $region44: #{tpu_custom_call.1} parent=1 // pred_region
      %875 = dma.done [#allocation4], 32
    $region45: #{tpu_custom_call.1} parent=1 // pred_fallthru
      _
    // Predicated region
    $region46: #{tpu_custom_call.1} parent=1 // pred_check
      _
    $region47: #{tpu_custom_call.1} parent=1 // pred_check_branch
      %877 = sbr.rel (0) target = $region49
    $region48: #{tpu_custom_call.1} parent=1 // pred_region
      %878 = dma.done [#allocation12], 32
    $region49: #{tpu_custom_call.1} parent=1 // pred_fallthru
      _
    %879 = vsyncpa [#allocation3], 1
    %880 = vsyncpa [#allocation6], 1
    %881 = vsyncpa [#allocation9], 1
    %882 = vsyncpa [#allocation4], 1
    %883 = vsyncpa [#allocation12], 1

</llo_original>
